<compile_context>
chip_gen: v5e
topology: v5e:2x2
jax: 0.10.0
libtpu: 0.0.40
codegen_flags: <defaults>
</compile_context>

<pallas_src>
import numpy as np
import jax
import jax.numpy as jnp
from jax.experimental import pallas as pl
from jax.experimental.pallas import tpu as pltpu


def _make_kernel(TB, L, P1, P2, K1, K2, pool):
    N = TB * L
    pad1 = (K1 - 1) // 2
    pad2 = (K2 - 1) // 2
    n_left = max(pad1, pad2)                         # deepest left-edge fixup
    n_right = max(K1 - 1 - pad1, K2 - 1 - pad2)      # deepest right-edge fixup

    def kernel(x_ref, w1_ref, b1_ref, w2_ref, b2_ref, out_ref):
        x = x_ref[0]                 # (1, N): batch tile, spectra flattened on lanes
        w1 = w1_ref[...]             # (P1, K1)
        b1 = b1_ref[...]             # (P1, 1)
        w2 = w2_ref[...]             # (P2, K2*P1)
        b2 = b2_ref[...]             # (P2, 1)

        # ---- hoisted lane bookkeeping (computed once per grid step) ----
        pos = jax.lax.broadcasted_iota(jnp.int32, (1, N), 1)
        if (L & (L - 1)) == 0:
            l_mod = jnp.bitwise_and(pos, L - 1)      # position within a length-L spectrum
        else:
            l_mod = jax.lax.rem(pos, jnp.int32(L))
        masks_left = [l_mod == m for m in range(n_left)]               # l == m
        masks_right = [l_mod == (L - 1 - m) for m in range(n_right)]   # l == L-1-m

        def build_taps(v, K, pad):
            """v: (R, N).  Returns (K*R, N): row k*R + r = v[r] shifted by (k - pad)
            within each length-L segment, replicate ('same') padding at the edges."""
            shifts = [k - pad for k in range(K)]
            rolled = {0: v}
            for a in range(min(shifts), max(shifts) + 1):
                if a != 0:
                    rolled[a] = pltpu.roll(v, shift=(-a) % N, axis=1)
            taps = []
            for d in shifts:
                t = rolled[d]
                if d > 0:        # right edge: l >= L-d must read v[., L-1]
                    for m in range(d):
                        t = jnp.where(masks_right[m], rolled[m], t)
                elif d < 0:      # left edge: l < -d must read v[., 0]
                    for m in range(-d):
                        t = jnp.where(masks_left[m], rolled[-m], t)
                taps.append(t)
            return jnp.concatenate(taps, axis=0)

        # ---- conv1 (1 -> P1, 'same', replicate) + ReLU: one MXU matmul ----
        taps1 = build_taps(x, K1, pad1)                                        # (K1, N)
        h1 = jnp.maximum(
            jnp.dot(w1, taps1, preferred_element_type=jnp.float32) + b1, 0.0)  # (P1, N)

        # ---- conv2 (P1 -> P2, 'same', replicate) + ReLU: one MXU matmul ----
        taps2 = build_taps(h1, K2, pad2)                                       # (K2*P1, N)
        h2 = jnp.maximum(
            jnp.dot(w2, taps2, preferred_element_type=jnp.float32) + b2, 0.0)  # (P2, N)

        # ---- residual add of the raw spectrum (broadcast over channels) + ReLU ----
        res = jnp.maximum(h2 + x, 0.0)                                         # (P2, N)

        # ---- MaxPool1d(pool): window max aligned at window-start lanes ----
        wm = res
        for m in range(1, pool):
            wm = jnp.maximum(wm, pltpu.roll(res, shift=(N - m) % N, axis=1))
        out_ref[0] = wm              # (P2, N): lane-dense unmasked stores

    return kernel


def spectral_convolution_forward(x, w1, b1, w2, b2, pool, block_batch=None):
    """x: (B, L).  w1: (P1, 1, K1), b1: (P1,), w2: (P2, P1, K2), b2: (P2,).
    Returns (B, P2, L_out) in the PyTorch NCL layout."""
    x = jnp.asarray(x, jnp.float32)
    w1 = jnp.asarray(w1, jnp.float32)
    b1 = jnp.asarray(b1, jnp.float32)
    w2 = jnp.asarray(w2, jnp.float32)
    b2 = jnp.asarray(b2, jnp.float32)

    B, L = x.shape
    P1, _, K1 = w1.shape
    P2, _, K2 = w2.shape
    if max(K1, K2) > L:
        raise ValueError("kernel sizes must not exceed the spectrum length")
    L_out = (L - pool) // pool + 1

    # Batch tile: flat lane axis (TB*L) >= 256 and TB a multiple of 8; pad B up to a
    # multiple of TB instead of shrinking TB to a divisor of B.
    if block_batch is None:
        TB = max(8, -(-256 // L))
    else:
        TB = max(8, int(block_batch))
    TB = ((TB + 7) // 8) * 8
    NB = -(-B // TB)
    B_pad = NB * TB
    if B_pad != B:
        x = jnp.pad(x, ((0, B_pad - B), (0, 0)))

    N = TB * L
    x_flat = x.reshape(NB, 1, N)                    # free row-major reshape (HBM)

    # Weights as 2-D VMEM matmul operands (column index of w2_mat is k*P1 + p).
    w1_mat = w1.reshape(P1, K1)
    b1_col = b1.reshape(P1, 1)
    w2_mat = jnp.transpose(w2, (0, 2, 1)).reshape(P2, K2 * P1)
    b2_col = b2.reshape(P2, 1)

    kernel = _make_kernel(TB, L, P1, P2, K1, K2, pool)

    out_flat = pl.pallas_call(
        kernel,
        out_shape=jax.ShapeDtypeStruct((NB, P2, N), jnp.float32),
        grid=(NB,),
        in_specs=[
            pl.BlockSpec((1, 1, N), lambda i: (i, 0, 0)),        # batch tile (flat lanes)
            pl.BlockSpec((P1, K1), lambda i: (0, 0)),            # conv1 weights
            pl.BlockSpec((P1, 1), lambda i: (0, 0)),             # conv1 bias
            pl.BlockSpec((P2, K2 * P1), lambda i: (0, 0)),       # conv2 weights
            pl.BlockSpec((P2, 1), lambda i: (0, 0)),             # conv2 bias
        ],
        out_specs=pl.BlockSpec((1, P2, N), lambda i: (i, 0, 0)),
        compiler_params=pltpu.CompilerParams(
            dimension_semantics=("parallel",)),                  # 2-TC sharding on v7x
    )(x_flat, w1_mat, b1_col, w2_mat, b2_col)

    # TODO(synk): move the stride-`pool` window-start downsample in-kernel once Mosaic
    # lane-strided slices are reliable; the kernel already stores lane-dense window
    # maxima, so this is pure layout plumbing on a tiny array.
    out = out_flat.reshape(NB, P2, TB, L)[..., : L_out * pool : pool]   # (NB,P2,TB,L_out)
    out = jnp.transpose(out, (0, 2, 1, 3)).reshape(B_pad, P2, L_out)
    return out[:B]


def ref_forward_np(x, w1, b1, w2, b2, pool):
    """Pure numpy reference of the PyTorch forward (float32)."""
    x = np.asarray(x, np.float32)
    w1 = np.asarray(w1, np.float32); b1 = np.asarray(b1, np.float32)
    w2 = np.asarray(w2, np.float32); b2 = np.asarray(b2, np.float32)
    B, L = x.shape
    P1, _, K1 = w1.shape
    P2, _, K2 = w2.shape
    pad1 = (K1 - 1) // 2
    pad2 = (K2 - 1) // 2
    clip = lambda i: min(max(i, 0), L - 1)

    h1 = np.zeros((B, P1, L), np.float32)
    for b in range(B):
        for p in range(P1):
            for l in range(L):
                s = b1[p]
                for k in range(K1):
                    s += w1[p, 0, k] * x[b, clip(l + k - pad1)]
                h1[b, p, l] = max(s, 0.0)

    h2 = np.zeros((B, P2, L), np.float32)
    for b in range(B):
        for q in range(P2):
            for l in range(L):
                s = b2[q]
                for p in range(P1):
                    for k in range(K2):
                        s += w2[q, p, k] * h1[b, p, clip(l + k - pad2)]
                h2[b, q, l] = max(s, 0.0)

    res = np.maximum(h2 + x[:, None, :], 0.0)
    L_out = (L - pool) // pool + 1
    out = np.zeros((B, P2, L_out), np.float32)
    for j in range(L_out):
        out[:, :, j] = res[:, :, j * pool:j * pool + pool].max(axis=-1)
    return out


if __name__ == "__main__":
    # hyperparams = [n_channels, n_planes1, n_planes2, kernel_size1, kernel_size2, pool_size]
    n_channels, P1, P2, K1, K2, pool = 16, 6, 5, 3, 5, 2
    B = 4

    key = jax.random.PRNGKey(0)
    kx, k1, k2, k3, k4 = jax.random.split(key, 5)
    x = jax.random.normal(kx, (B, n_channels), dtype=jnp.float32)

    # Deterministic parameter init (PyTorch Conv1d-like uniform bounds).
    bound1 = float(1.0 / np.sqrt(1 * K1))
    bound2 = float(1.0 / np.sqrt(P1 * K2))
    w1 = jax.random.uniform(k1, (P1, 1, K1), jnp.float32, -bound1, bound1)
    b1 = jax.random.uniform(k2, (P1,), jnp.float32, -bound1, bound1)
    w2 = jax.random.uniform(k3, (P2, P1, K2), jnp.float32, -bound2, bound2)
    b2 = jax.random.uniform(k4, (P2,), jnp.float32, -bound2, bound2)

    # Default tile: TB=16 (TB*L = 256 lanes); B=4 is padded up to one 16-row tile.
    out = spectral_convolution_forward(x, w1, b1, w2, b2, pool)
    out = jax.block_until_ready(out)

    ref = ref_forward_np(np.asarray(x), np.asarray(w1), np.asarray(b1),
                         np.asarray(w2), np.asarray(b2), pool)
    assert out.shape == (B, P2, n_channels // pool), out.shape
    np.testing.assert_allclose(np.asarray(out), ref, rtol=1e-4, atol=1e-4)
    print("KERNEL_OK")
</pallas_src>

<mosaic_0001>
module attributes {stable_mosaic.version = 11 : i64} {
  func.func @kernel(%arg0: i32, %arg1: memref<1x1x256xf32, #tpu.memory_space<vmem>>, %arg2: memref<6x3xf32, #tpu.memory_space<vmem>>, %arg3: memref<6x1xf32, #tpu.memory_space<vmem>>, %arg4: memref<5x30xf32, #tpu.memory_space<vmem>>, %arg5: memref<5x1xf32, #tpu.memory_space<vmem>>, %arg6: memref<1x5x256xf32, #tpu.memory_space<vmem>>) attributes {dimension_semantics = [#tpu.dimension_semantics<parallel>], iteration_bounds = array<i64: 1>, scalar_prefetch = 0 : i64, scratch_operands = 0 : i64, tpu.core_type = #tpu.core_type<tc>, window_params = [{transform_indices = @transform_0, window_bounds = array<i64: 1, 1, 256>}, {pipeline_mode = #tpu.pipeline_mode<synchronous>, transform_indices = @transform_1, window_bounds = array<i64: 6, 3>}, {pipeline_mode = #tpu.pipeline_mode<synchronous>, transform_indices = @transform_2, window_bounds = array<i64: 6, 1>}, {pipeline_mode = #tpu.pipeline_mode<synchronous>, transform_indices = @transform_3, window_bounds = array<i64: 5, 30>}, {pipeline_mode = #tpu.pipeline_mode<synchronous>, transform_indices = @transform_4, window_bounds = array<i64: 5, 1>}, {transform_indices = @transform_5, window_bounds = array<i64: 1, 5, 256>}]} {
    %c0 = arith.constant 0 : index
    %c0_0 = arith.constant 0 : index
    %c0_1 = arith.constant 0 : index
    %0 = vector.load %arg1[%c0, %c0_0, %c0_1] : memref<1x1x256xf32, #tpu.memory_space<vmem>>, vector<1x1x256xf32>
    %1 = vector.shape_cast %0 : vector<1x1x256xf32> to vector<1x256xf32>
    %c0_2 = arith.constant 0 : index
    %c0_3 = arith.constant 0 : index
    %2 = vector.load %arg2[%c0_2, %c0_3] : memref<6x3xf32, #tpu.memory_space<vmem>>, vector<6x3xf32>
    %c0_4 = arith.constant 0 : index
    %c0_5 = arith.constant 0 : index
    %3 = vector.load %arg3[%c0_4, %c0_5] : memref<6x1xf32, #tpu.memory_space<vmem>>, vector<6x1xf32>
    %c0_6 = arith.constant 0 : index
    %c0_7 = arith.constant 0 : index
    %4 = vector.load %arg4[%c0_6, %c0_7] : memref<5x30xf32, #tpu.memory_space<vmem>>, vector<5x30xf32>
    %c0_8 = arith.constant 0 : index
    %c0_9 = arith.constant 0 : index
    %5 = vector.load %arg5[%c0_8, %c0_9] : memref<5x1xf32, #tpu.memory_space<vmem>>, vector<5x1xf32>
    %6 = tpu.iota {dimensions = array<i32: 1>} : vector<1x256xi32>
    %c15_i32 = arith.constant 15 : i32
    %7 = vector.broadcast %c15_i32 : i32 to vector<1x256xi32>
    %8 = arith.andi %6, %7 : vector<1x256xi32>
    %c0_i32 = arith.constant 0 : i32
    %9 = vector.broadcast %c0_i32 : i32 to vector<1x256xi32>
    %10 = arith.cmpi eq, %8, %9 : vector<1x256xi32>
    %c1_i32 = arith.constant 1 : i32
    %11 = vector.broadcast %c1_i32 : i32 to vector<1x256xi32>
    %12 = arith.cmpi eq, %8, %11 : vector<1x256xi32>
    %c15_i32_10 = arith.constant 15 : i32
    %13 = vector.broadcast %c15_i32_10 : i32 to vector<1x256xi32>
    %14 = arith.cmpi eq, %8, %13 : vector<1x256xi32>
    %c14_i32 = arith.constant 14 : i32
    %15 = vector.broadcast %c14_i32 : i32 to vector<1x256xi32>
    %16 = arith.cmpi eq, %8, %15 : vector<1x256xi32>
    %c1_i32_11 = arith.constant 1 : i32
    %17 = tpu.dynamic_rotate %1 by %c1_i32_11 dim 1 : vector<1x256xf32>, i32 -> vector<1x256xf32>
    %c255_i32 = arith.constant 255 : i32
    %18 = tpu.dynamic_rotate %1 by %c255_i32 dim 1 : vector<1x256xf32>, i32 -> vector<1x256xf32>
    %19 = arith.select %10, %1, %17 : vector<1x256xi1>, vector<1x256xf32>
    %20 = arith.select %14, %1, %18 : vector<1x256xi1>, vector<1x256xf32>
    %21 = tpu.concatenate %19, %1, %20 in 0 : vector<1x256xf32>, vector<1x256xf32>, vector<1x256xf32> -> vector<3x256xf32>
    %cst = arith.constant dense<0.000000e+00> : vector<6x256xf32>
    %22 = tpu.matmul %2, %21, %cst {dimension_numbers = #tpu.dot_dimension_numbers<[1], [0], [0], [1], [0, 0, 1, 1], [], []>} : vector<6x3xf32>, vector<3x256xf32>, vector<6x256xf32> -> vector<6x256xf32>
    %23 = vector.broadcast %3 : vector<6x1xf32> to vector<6x256xf32>
    %24 = arith.addf %22, %23 : vector<6x256xf32>
    %cst_12 = arith.constant 0.000000e+00 : f32
    %25 = vector.broadcast %cst_12 : f32 to vector<6x256xf32>
    %26 = arith.maximumf %24, %25 : vector<6x256xf32>
    %c2_i32 = arith.constant 2 : i32
    %27 = tpu.dynamic_rotate %26 by %c2_i32 dim 1 : vector<6x256xf32>, i32 -> vector<6x256xf32>
    %c1_i32_13 = arith.constant 1 : i32
    %28 = tpu.dynamic_rotate %26 by %c1_i32_13 dim 1 : vector<6x256xf32>, i32 -> vector<6x256xf32>
    %c255_i32_14 = arith.constant 255 : i32
    %29 = tpu.dynamic_rotate %26 by %c255_i32_14 dim 1 : vector<6x256xf32>, i32 -> vector<6x256xf32>
    %c254_i32 = arith.constant 254 : i32
    %30 = tpu.dynamic_rotate %26 by %c254_i32 dim 1 : vector<6x256xf32>, i32 -> vector<6x256xf32>
    %31 = vector.shape_cast %10 : vector<1x256xi1> to vector<1x256xi1>
    %32 = vector.broadcast %31 : vector<1x256xi1> to vector<6x256xi1>
    %33 = arith.select %32, %26, %27 : vector<6x256xi1>, vector<6x256xf32>
    %34 = vector.shape_cast %12 : vector<1x256xi1> to vector<1x256xi1>
    %35 = vector.broadcast %34 : vector<1x256xi1> to vector<6x256xi1>
    %36 = arith.select %35, %28, %33 : vector<6x256xi1>, vector<6x256xf32>
    %37 = vector.shape_cast %10 : vector<1x256xi1> to vector<1x256xi1>
    %38 = vector.broadcast %37 : vector<1x256xi1> to vector<6x256xi1>
    %39 = arith.select %38, %26, %28 : vector<6x256xi1>, vector<6x256xf32>
    %40 = vector.shape_cast %14 : vector<1x256xi1> to vector<1x256xi1>
    %41 = vector.broadcast %40 : vector<1x256xi1> to vector<6x256xi1>
    %42 = arith.select %41, %26, %29 : vector<6x256xi1>, vector<6x256xf32>
    %43 = vector.shape_cast %14 : vector<1x256xi1> to vector<1x256xi1>
    %44 = vector.broadcast %43 : vector<1x256xi1> to vector<6x256xi1>
    %45 = arith.select %44, %26, %30 : vector<6x256xi1>, vector<6x256xf32>
    %46 = vector.shape_cast %16 : vector<1x256xi1> to vector<1x256xi1>
    %47 = vector.broadcast %46 : vector<1x256xi1> to vector<6x256xi1>
    %48 = arith.select %47, %29, %45 : vector<6x256xi1>, vector<6x256xf32>
    %49 = tpu.concatenate %36, %39, %26, %42, %48 in 0 : vector<6x256xf32>, vector<6x256xf32>, vector<6x256xf32>, vector<6x256xf32>, vector<6x256xf32> -> vector<30x256xf32>
    %cst_15 = arith.constant dense<0.000000e+00> : vector<5x256xf32>
    %50 = tpu.matmul %4, %49, %cst_15 {dimension_numbers = #tpu.dot_dimension_numbers<[1], [0], [0], [1], [0, 0, 1, 1], [], []>} : vector<5x30xf32>, vector<30x256xf32>, vector<5x256xf32> -> vector<5x256xf32>
    %51 = vector.broadcast %5 : vector<5x1xf32> to vector<5x256xf32>
    %52 = arith.addf %50, %51 : vector<5x256xf32>
    %cst_16 = arith.constant 0.000000e+00 : f32
    %53 = vector.broadcast %cst_16 : f32 to vector<5x256xf32>
    %54 = arith.maximumf %52, %53 : vector<5x256xf32>
    %55 = vector.broadcast %1 : vector<1x256xf32> to vector<5x256xf32>
    %56 = arith.addf %54, %55 : vector<5x256xf32>
    %cst_17 = arith.constant 0.000000e+00 : f32
    %57 = vector.broadcast %cst_17 : f32 to vector<5x256xf32>
    %58 = arith.maximumf %56, %57 : vector<5x256xf32>
    %c255_i32_18 = arith.constant 255 : i32
    %59 = tpu.dynamic_rotate %58 by %c255_i32_18 dim 1 : vector<5x256xf32>, i32 -> vector<5x256xf32>
    %60 = arith.maximumf %58, %59 : vector<5x256xf32>
    %c0_19 = arith.constant 0 : index
    %c0_20 = arith.constant 0 : index
    %c0_21 = arith.constant 0 : index
    %61 = vector.load %arg6[%c0_19, %c0_20, %c0_21] : memref<1x5x256xf32, #tpu.memory_space<vmem>>, vector<1x5x256xf32>
    %62 = vector.shape_cast %61 : vector<1x5x256xf32> to vector<5x256xf32>
    %63 = vector.shape_cast %60 : vector<5x256xf32> to vector<1x5x256xf32>
    tpu.vector_store %arg6[%c0_19, %c0_20, %c0_21], %63 {strides = array<i32>} : memref<1x5x256xf32, #tpu.memory_space<vmem>>, vector<1x5x256xf32>,
    return
  }
  func.func @transform_0(%arg0: i32) -> (i32, i32, i32) {
    %c0_i32 = arith.constant 0 : i32
    %c0_i32_0 = arith.constant 0 : i32
    %c0_i32_1 = arith.constant 0 : i32
    return %arg0, %c0_i32, %c0_i32_0 : i32, i32, i32
  }
  func.func @transform_1(%arg0: i32) -> (i32, i32) {
    %c0_i32 = arith.constant 0 : i32
    %c0_i32_0 = arith.constant 0 : i32
    %c0_i32_1 = arith.constant 0 : i32
    return %c0_i32, %c0_i32_0 : i32, i32
  }
  func.func @transform_2(%arg0: i32) -> (i32, i32) {
    %c0_i32 = arith.constant 0 : i32
    %c0_i32_0 = arith.constant 0 : i32
    %c0_i32_1 = arith.constant 0 : i32
    return %c0_i32, %c0_i32_0 : i32, i32
  }
  func.func @transform_3(%arg0: i32) -> (i32, i32) {
    %c0_i32 = arith.constant 0 : i32
    %c0_i32_0 = arith.constant 0 : i32
    %c0_i32_1 = arith.constant 0 : i32
    return %c0_i32, %c0_i32_0 : i32, i32
  }
  func.func @transform_4(%arg0: i32) -> (i32, i32) {
    %c0_i32 = arith.constant 0 : i32
    %c0_i32_0 = arith.constant 0 : i32
    %c0_i32_1 = arith.constant 0 : i32
    return %c0_i32, %c0_i32_0 : i32, i32
  }
  func.func @transform_5(%arg0: i32) -> (i32, i32, i32) {
    %c0_i32 = arith.constant 0 : i32
    %c0_i32_0 = arith.constant 0 : i32
    %c0_i32_1 = arith.constant 0 : i32
    return %arg0, %c0_i32, %c0_i32_0 : i32, i32, i32
  }
}

</mosaic_0001>

<llo_original>
// kernel: tpu_custom_call.1
$region0: #{tpu_custom_call.1}
  #allocation0 [shape = 'u32[]', space=smem, size = 0x4, offset = 0x4, fixed_abs, tag = 'smem constant byte address 0x4 - core index']
  #allocation1 [shape = 'u32[72,128]{1,0:T(1,128)}', space=vmem, size = 0x9000, scoped, tag = 'internal scratch']
  %s0 = inlined_call_operand.vmem [shape: f32[1,1,256], index: 0, kind: input, shape index: {}]
  %s1 = inlined_call_operand.vmem [shape: f32[6,3], index: 1, kind: input, shape index: {}]
  %s2 = inlined_call_operand.vmem [shape: f32[6,1], index: 2, kind: input, shape index: {}]
  %s3 = inlined_call_operand.vmem [shape: f32[5,30], index: 3, kind: input, shape index: {}]
  %s4 = inlined_call_operand.vmem [shape: f32[5,1], index: 4, kind: input, shape index: {}]
  %s5 = inlined_call_operand.vmem [shape: f32[1,5,256], index: 5, kind: output, shape index: {}]
  %s6 = sld [smem:[#allocation0]]
  $region30: #{tpu_custom_call.1} parent=0
    _
  %s8 = ssub.s32 1, %s6
  %s9 = scalar_select 0, %s8, %s6
  // Predicated region
  $region2: #{tpu_custom_call.1} parent=0 // pred_check
    _
  $region3: #{tpu_custom_call.1} parent=0 // pred_check_branch
    %11 = sbr.rel (0) target = $region5
  $region4: #{tpu_custom_call.1} parent=0 // pred_region
    _
  $region5: #{tpu_custom_call.1} parent=0 // pred_fallthru
    _
  // Predicated region
  $region6: #{tpu_custom_call.1} parent=0 // pred_check
    _
  $region7: #{tpu_custom_call.1} parent=0 // pred_check_branch
    %13 = sbr.rel (0) target = $region9
  $region8: #{tpu_custom_call.1} parent=0 // pred_region
    _
  $region9: #{tpu_custom_call.1} parent=0 // pred_fallthru
    _
  // Predicated region
  $region10: #{tpu_custom_call.1} parent=0 // pred_check
    _
  $region11: #{tpu_custom_call.1} parent=0 // pred_check_branch
    %15 = sbr.rel (0) target = $region13
  $region12: #{tpu_custom_call.1} parent=0 // pred_region
    _
  $region13: #{tpu_custom_call.1} parent=0 // pred_fallthru
    _
  // Predicated region
  $region14: #{tpu_custom_call.1} parent=0 // pred_check
    _
  $region15: #{tpu_custom_call.1} parent=0 // pred_check_branch
    %17 = sbr.rel (0) target = $region17
  $region16: #{tpu_custom_call.1} parent=0 // pred_region
    _
  $region17: #{tpu_custom_call.1} parent=0 // pred_fallthru
    _
  // Predicated region
  $region18: #{tpu_custom_call.1} parent=0 // pred_check
    _
  $region19: #{tpu_custom_call.1} parent=0 // pred_check_branch
    %19 = sbr.rel (0) target = $region21
  $region20: #{tpu_custom_call.1} parent=0 // pred_region
    _
  $region21: #{tpu_custom_call.1} parent=0 // pred_fallthru
    _
  %v20 = vld [vmem:[%s0] sm:$0x3]
  %v21 = vld [vmem:[%s1] sm:$0x3f]
  %v22 = vld [vmem:[%s2] sm:$0x3f]
  %v23 = vld [vmem:[%s3] sm:$0x1f]
  %v24 = vld [vmem:[%s4] sm:$0x1f]
  %v25 = vlaneseq
  %v26 = vand.u32 %v25, 127
  %v27 = vadd.s32 %v26, 128
  %v28 = vand.u32 %v26, 15
  %v29 = vand.u32 %v27, 15
  %vm30 = vcmp.eq.s32.totalorder %v28, 0
  %vm31 = vcmp.eq.s32.totalorder %v29, 0
  %vm32 = vcmp.eq.s32.totalorder %v28, 1
  %vm33 = vcmp.eq.s32.totalorder %v29, 1
  %vm34 = vcmp.eq.s32.totalorder %v28, 15
  %vm35 = vcmp.eq.s32.totalorder %v29, 15
  %vm36 = vcmp.eq.s32.totalorder %v28, 14
  %vm37 = vcmp.eq.s32.totalorder %v29, 14
  %v39 = vperm.slane %v20, 0
  %v40 = vperm.slane %v20, 1
  %43 = vrot.lane.b32.xlu0 %v39, 1
  %v44 = vpop.permute.xlu0 %43
  %45 = vrot.lane.b32.xlu0 %v40, 1
  %v46 = vpop.permute.xlu0 %45
  %vm47 = vcmp.lt.s32.totalorder %v26, 1
  %v48 = vsel %vm47, %v44, %v46
  %v49 = vsel %vm47, %v46, %v44
  %50 = vrot.lane.b32.xlu0 %v39, 127
  %v51 = vpop.permute.xlu0 %50
  %52 = vrot.lane.b32.xlu0 %v40, 127
  %v53 = vpop.permute.xlu0 %52
  %vm54 = vcmp.lt.s32.totalorder %v26, 127
  %v55 = vsel %vm54, %v51, %v53
  %v56 = vsel %vm54, %v53, %v51
  %v57 = vsel %vm30, %v39, %v49
  %v58 = vsel %vm31, %v40, %v48
  %v59 = vsel %vm34, %v39, %v55
  %v60 = vsel %vm35, %v40, %v56
  %v63 = vrot.slane %v59, 6
  %v64 = vrot.slane %v60, 6
  %vm67 = vcmask 1040384
  %v68 = vsel %vm67, %v57, %v39
  %v69 = vsel %vm67, %v58, %v40
  %vm70 = vcmask 1041408
  %v71 = vsel %vm70, %v68, %v63
  %v72 = vsel %vm70, %v69, %v64
  %74 = vset.pattern.permute.xlu0 0
  %75 = vperm.xlu0 %74, %v22
  %v76 = vpop.permute.xlu0 %75
  %vm78 = vcmask 23552
  %v80 = vsel %vm78, %v21, 0
  %vm82 = vcmask 1042432
  %v84 = vsel %vm82, %v71, 0
  %v87 = vsel %vm82, %v72, 0
  %89 = vmatpush.msra.mxu0 0.0
  %90 = vmatpush.msra.mxu0 0.0
  %91 = vmatpush.msra.mxu0 0.0
  %92 = vmatpush.msra.mxu0 0.0
  %93 = vmatpush.msra.mxu0 0.0
  %94 = vmatpush.msra.mxu0 0.0
  %95 = vmatpush.msra.mxu0 0.0
  %96 = vmatpush.msra.mxu0 0.0
  %97 = vmatpush.msra.mxu0 0.0
  %98 = vmatpush.msra.mxu0 0.0
  %99 = vmatpush.msra.mxu0 0.0
  %100 = vmatpush.msra.mxu0 0.0
  %101 = vmatpush.msra.mxu0 0.0
  %102 = vmatpush.msra.mxu0 0.0
  %103 = vmatpush.msra.mxu0 0.0
  %104 = vmatpush.msra.mxu0 %v84
  %105 = vmatmul.f32.gmra.mxu0 %v80
  %v106 = vpop.f32.mrf.mxu0
  %v107 = vadd.f32 %v76, %v106
  %108 = vdwg.mxu0
  %109 = vmatpush.msra.mxu0 0.0
  %110 = vmatpush.msra.mxu0 0.0
  %111 = vmatpush.msra.mxu0 0.0
  %112 = vmatpush.msra.mxu0 0.0
  %113 = vmatpush.msra.mxu0 0.0
  %114 = vmatpush.msra.mxu0 0.0
  %115 = vmatpush.msra.mxu0 0.0
  %116 = vmatpush.msra.mxu0 0.0
  %117 = vmatpush.msra.mxu0 0.0
  %118 = vmatpush.msra.mxu0 0.0
  %119 = vmatpush.msra.mxu0 0.0
  %120 = vmatpush.msra.mxu0 0.0
  %121 = vmatpush.msra.mxu0 0.0
  %122 = vmatpush.msra.mxu0 0.0
  %123 = vmatpush.msra.mxu0 0.0
  %124 = vmatpush.msra.mxu0 %v87
  %125 = vmatmul.f32.gmra.mxu0 %v80
  %v126 = vpop.f32.mrf.mxu0
  %v127 = vadd.f32 %v76, %v126
  %128 = vdwg.mxu0
  %v129 = vmax.f32 %v107, 0.0
  %v130 = vmax.f32 %v127, 0.0
  %131 = vrot.lane.b32.xlu0 %v129, 2
  %v132 = vpop.permute.xlu0 %131
  %133 = vrot.lane.b32.xlu0 %v130, 2
  %v134 = vpop.permute.xlu0 %133
  %vm135 = vcmp.lt.s32.totalorder %v26, 2
  %v136 = vsel %vm135, %v132, %v134
  %v137 = vsel %vm135, %v134, %v132
  %138 = vrot.lane.b32.xlu0 %v129, 1
  %v139 = vpop.permute.xlu0 %138
  %140 = vrot.lane.b32.xlu0 %v130, 1
  %v141 = vpop.permute.xlu0 %140
  %v142 = vsel %vm47, %v139, %v141
  %v143 = vsel %vm47, %v141, %v139
  %144 = vrot.lane.b32.xlu0 %v129, 127
  %v145 = vpop.permute.xlu0 %144
  %146 = vrot.lane.b32.xlu0 %v130, 127
  %v147 = vpop.permute.xlu0 %146
  %v148 = vsel %vm54, %v145, %v147
  %v149 = vsel %vm54, %v147, %v145
  %150 = vrot.lane.b32.xlu0 %v129, 126
  %v151 = vpop.permute.xlu0 %150
  %152 = vrot.lane.b32.xlu0 %v130, 126
  %v153 = vpop.permute.xlu0 %152
  %vm154 = vcmp.lt.s32.totalorder %v26, 126
  %v155 = vsel %vm154, %v151, %v153
  %v156 = vsel %vm154, %v153, %v151
  %v157 = vsel %vm30, 1, 0
  %v158 = vsel %vm31, 1, 0
  %vm159 = vcmp.eq.s32.totalorder %v157, 1
  %vm160 = vcmp.eq.s32.totalorder %v158, 1
  %v161 = vsel %vm159, %v129, %v137
  %v162 = vsel %vm160, %v130, %v136
  %v163 = vsel %vm32, 1, 0
  %v164 = vsel %vm33, 1, 0
  %vm165 = vcmp.eq.s32.totalorder %v163, 1
  %vm166 = vcmp.eq.s32.totalorder %v164, 1
  %v167 = vsel %vm165, %v143, %v161
  %v168 = vsel %vm166, %v142, %v162
  %v169 = vsel %vm159, %v129, %v143
  %v170 = vsel %vm160, %v130, %v142
  %v171 = vsel %vm34, 1, 0
  %v172 = vsel %vm35, 1, 0
  %vm173 = vcmp.eq.s32.totalorder %v171, 1
  %vm174 = vcmp.eq.s32.totalorder %v172, 1
  %v175 = vsel %vm173, %v129, %v148
  %v176 = vsel %vm174, %v130, %v149
  %v177 = vsel %vm173, %v129, %v155
  %v178 = vsel %vm174, %v130, %v156
  %v179 = vsel %vm36, 1, 0
  %v180 = vsel %vm37, 1, 0
  %vm181 = vcmp.eq.s32.totalorder %v179, 1
  %vm182 = vcmp.eq.s32.totalorder %v180, 1
  %v183 = vsel %vm181, %v148, %v177
  %v184 = vsel %vm182, %v149, %v178
  %v187 = vrot.slane %v169, 2
  %v188 = vrot.slane %v170, 2
  %v193 = vrot.slane %v129, 4
  %v194 = vrot.slane %v130, 4
  %v199 = vrot.slane %v175, 6
  %v200 = vrot.slane %v176, 6
  %vm203 = vcmask 1045504
  %v204 = vsel %vm203, %v167, %v187
  %v205 = vsel %vm203, %v168, %v188
  %vm206 = vcmask 1043456
  %v207 = vsel %vm206, %v187, %v193
  %v208 = vsel %vm206, %v188, %v194
  %v209 = vsel %vm70, %v193, %v199
  %v210 = vsel %vm70, %v194, %v200
  %212 = vset.pattern.permute.xlu0 0
  %213 = vperm.xlu0 %212, %v24
  %v214 = vpop.permute.xlu0 %213
  %vm216 = vcmask 244736
  %v218 = vsel %vm216, %v23, 0
  %v221 = vsel %vm203, %v183, 0
  %v224 = vsel %vm203, %v184, 0
  %226 = vmatpush.msra.mxu0 0.0
  %227 = vmatpush.msra.mxu0 0.0
  %228 = vmatpush.msra.mxu0 0.0
  %229 = vmatpush.msra.mxu0 0.0
  %230 = vmatpush.msra.mxu0 0.0
  %231 = vmatpush.msra.mxu0 0.0
  %232 = vmatpush.msra.mxu0 0.0
  %233 = vmatpush.msra.mxu0 0.0
  %234 = vmatpush.msra.mxu0 0.0
  %235 = vmatpush.msra.mxu0 0.0
  %236 = vmatpush.msra.mxu0 0.0
  %237 = vmatpush.msra.mxu0 0.0
  %238 = vmatpush.msra.mxu0 %v221
  %239 = vmatpush.msra.mxu0 %v209
  %240 = vmatpush.msra.mxu0 %v207
  %241 = vmatpush.msra.mxu0 %v204
  %242 = vmatmul.f32.gmra.mxu0 %v218
  %v243 = vpop.f32.mrf.mxu0
  %v244 = vadd.f32 %v214, %v243
  %245 = vdwg.mxu0
  %246 = vmatpush.msra.mxu0 0.0
  %247 = vmatpush.msra.mxu0 0.0
  %248 = vmatpush.msra.mxu0 0.0
  %249 = vmatpush.msra.mxu0 0.0
  %250 = vmatpush.msra.mxu0 0.0
  %251 = vmatpush.msra.mxu0 0.0
  %252 = vmatpush.msra.mxu0 0.0
  %253 = vmatpush.msra.mxu0 0.0
  %254 = vmatpush.msra.mxu0 0.0
  %255 = vmatpush.msra.mxu0 0.0
  %256 = vmatpush.msra.mxu0 0.0
  %257 = vmatpush.msra.mxu0 0.0
  %258 = vmatpush.msra.mxu0 %v224
  %259 = vmatpush.msra.mxu0 %v210
  %260 = vmatpush.msra.mxu0 %v208
  %261 = vmatpush.msra.mxu0 %v205
  %262 = vmatmul.f32.gmra.mxu0 %v218
  %v263 = vpop.f32.mrf.mxu0
  %v264 = vadd.f32 %v214, %v263
  %265 = vdwg.mxu0
  %v266 = vmax.f32 %v244, 0.0
  %v267 = vmax.f32 %v264, 0.0
  %v268 = vadd.f32 %v266, %v39
  %v269 = vadd.f32 %v267, %v40
  %v270 = vmax.f32 %v268, 0.0
  %v271 = vmax.f32 %v269, 0.0
  %272 = vrot.lane.b32.xlu0 %v270, 127
  %v273 = vpop.permute.xlu0 %272
  %274 = vrot.lane.b32.xlu0 %v271, 127
  %v275 = vpop.permute.xlu0 %274
  %v276 = vsel %vm54, %v273, %v275
  %v277 = vsel %vm54, %v275, %v273
  %v278 = vmax.f32 %v270, %v276
  %v279 = vmax.f32 %v271, %v277
  %280 = vst [vmem:[%s5] sm:$0x1f] %v278
  %281 = vst [vmem:[%s5 + $0x8] sm:$0x1f] %v279
  // Predicated region
  $region22: #{tpu_custom_call.1} parent=0 // pred_check
    _
  $region23: #{tpu_custom_call.1} parent=0 // pred_check_branch
    %283 = sbr.rel (0) target = $region25
  $region24: #{tpu_custom_call.1} parent=0 // pred_region
    _
  $region25: #{tpu_custom_call.1} parent=0 // pred_fallthru
    _
  // Predicated region
  $region26: #{tpu_custom_call.1} parent=0 // pred_check
    _
  $region27: #{tpu_custom_call.1} parent=0 // pred_check_branch
    %285 = sbr.rel (0) target = $region29
  $region28: #{tpu_custom_call.1} parent=0 // pred_region
    _
  $region29: #{tpu_custom_call.1} parent=0 // pred_fallthru
    _

</llo_original>
